<compile_context>
chip_gen: v6e
topology: v6e:2x2x1
jax: 0.10.0
libtpu: 0.0.40
codegen_flags: <defaults>
</compile_context>

<pallas_src>
import functools

import jax
import jax.numpy as jnp
from jax import lax
from jax.experimental import pallas as pl
from jax.experimental.pallas import tpu as pltpu

SUBLANE = 16      # bf16-safe batch-tile granularity
CHUNK = 256       # rows per in-kernel step (bounds f32 vreg pressure)
MAX_TB = 2048     # max rows per grid step (amortizes ~0.35us step overhead)
MIN_TILES = 2     # keep both v7x TensorCores busy when batch allows


def _cdiv(a, b):
    return (a + b - 1) // b


def _round_up(x, m):
    return _cdiv(x, m) * m


def _choose_tiling(batch):
    """Return (tile_rows, padded_batch, n_tiles).

    Tiny batches: a single SUBLANE-padded tile.
    Otherwise: >= MIN_TILES tiles, rows = round_up(cdiv(batch, n_tiles),
    SUBLANE) capped at MAX_TB, so padding is bounded by SUBLANE per tile.
    """
    if batch <= MIN_TILES * SUBLANE:
        tb = _round_up(max(batch, 1), SUBLANE)
        return tb, tb, 1
    n_tiles = max(MIN_TILES, _cdiv(batch, MAX_TB))
    tb = min(MAX_TB, _round_up(_cdiv(batch, n_tiles), SUBLANE))
    n_tiles = _cdiv(batch, tb)
    return tb, tb * n_tiles, n_tiles


def _mlp_chunk(obs_ref, out_ref, row0, rows, w1, b1, w2, b2, w3, b3, w4, b4):
    """Run the fused 4-layer MLP on rows [row0, row0+rows) of this tile.

    bf16 MXU matmuls with f32 accumulation; bias-add / ReLU in f32 (v5e has no
    bf16 VPU); re-cast to bf16 right after each ReLU so only one wide f32
    temporary is live at a time.
    """
    x = obs_ref[pl.ds(row0, rows), :].astype(jnp.bfloat16)

    h = jnp.dot(x, w1, preferred_element_type=jnp.float32) + b1
    h = jnp.maximum(h, 0.0).astype(jnp.bfloat16)

    h = jnp.dot(h, w2, preferred_element_type=jnp.float32) + b2
    h = jnp.maximum(h, 0.0).astype(jnp.bfloat16)

    h = jnp.dot(h, w3, preferred_element_type=jnp.float32) + b3
    h = jnp.maximum(h, 0.0).astype(jnp.bfloat16)

    y = jnp.dot(h, w4, preferred_element_type=jnp.float32) + b4
    out_ref[pl.ds(row0, rows), :] = y.astype(out_ref.dtype)


def actor_kernel(obs_ref,
                 w1_ref, b1_ref, w2_ref, b2_ref,
                 w3_ref, b3_ref, w4_ref, b4_ref,
                 out_ref, *, chunk):
    tb = obs_ref.shape[0]
    n_full, rem = divmod(tb, chunk)   # static

    # Hoist the (tiny, VMEM-resident) weights/biases out of the chunk loop.
    w1 = w1_ref[...]; b1 = b1_ref[...]
    w2 = w2_ref[...]; b2 = b2_ref[...]
    w3 = w3_ref[...]; b3 = b3_ref[...]
    w4 = w4_ref[...]; b4 = b4_ref[...]

    if n_full > 0:
        def body(c, carry):
            row0 = pl.multiple_of(c * chunk, chunk)
            _mlp_chunk(obs_ref, out_ref, row0, chunk,
                       w1, b1, w2, b2, w3, b3, w4, b4)
            return carry
        # <= MAX_TB/CHUNK = 8 iterations: unroll for LLO scheduler visibility.
        lax.fori_loop(0, n_full, body, 0, unroll=True)

    if rem > 0:   # static SUBLANE-multiple remainder
        _mlp_chunk(obs_ref, out_ref, n_full * chunk, rem,
                   w1, b1, w2, b2, w3, b3, w4, b4)


@functools.partial(jax.jit, static_argnames=("num_actions",))
def actor_forward(obs, params, *, num_actions):
    """obs: [B, dim_obs] (f32 or bf16) -> logits [B, num_actions] f32."""
    w1, b1, w2, b2, w3, b3, w4, b4 = params
    batch, dim_obs = obs.shape
    out_pad = w4.shape[1]              # round_up(num_actions, 8)

    tb, b_pad, n_tiles = _choose_tiling(batch)
    if b_pad != batch:
        obs = jnp.pad(obs, ((0, b_pad - batch), (0, 0)))

    # Constant index_map -> DMA'd once, VMEM-resident across the grid.
    resident = lambda arr: pl.BlockSpec(arr.shape, lambda i: (0, 0))

    out = pl.pallas_call(
        functools.partial(actor_kernel, chunk=CHUNK),
        out_shape=jax.ShapeDtypeStruct((b_pad, out_pad), jnp.float32),
        grid=(n_tiles,),
        in_specs=[
            pl.BlockSpec((tb, dim_obs), lambda i: (i, 0)),   # batch-tiled obs
            resident(w1), resident(b1),
            resident(w2), resident(b2),
            resident(w3), resident(b3),
            resident(w4), resident(b4),
        ],
        # Narrow (lane-masked) store: out_pad << 128 columns, ~16x fewer HBM
        # writeback bytes than a 128-lane padded f32 block.
        out_specs=pl.BlockSpec((tb, out_pad), lambda i: (i, 0)),
        compiler_params=pltpu.CompilerParams(
            dimension_semantics=("parallel",),   # shards batch tiles on v7x
        ),
    )(obs, w1, b1, w2, b2, w3, b3, w4, b4)

    return out[:batch, :num_actions]


def init_actor_params(key, dim_obs, num_actions, fc1, fc2, fc3):
    """Matches maac's weights_init: kaiming_normal_(mode='fan_out',
    nonlinearity='relu') on the weights (for a PyTorch Linear weight of shape
    (out,in), fan_out == out_features -> std = sqrt(2/out_features)); biases
    keep nn.Linear's default U(-1/sqrt(in_features), 1/sqrt(in_features)).

    Weights stored bf16 [in, out]; last layer zero-padded to
    round_up(num_actions, 8) output columns for the narrow output store.
    """
    out_pad = _round_up(num_actions, 8)
    dims = [(dim_obs, fc1), (fc1, fc2), (fc2, fc3), (fc3, num_actions)]
    params = []
    for layer_idx, (fan_in, fan_out) in enumerate(dims):
        key, kw, kb = jax.random.split(key, 3)
        std = (2.0 / fan_out) ** 0.5           # mode='fan_out', relu
        w = jax.random.normal(kw, (fan_in, fan_out), dtype=jnp.float32) * std
        bound = 1.0 / (fan_in ** 0.5)
        b = jax.random.uniform(kb, (1, fan_out), dtype=jnp.float32,
                               minval=-bound, maxval=bound)
        if layer_idx == len(dims) - 1:
            w = jnp.pad(w, ((0, 0), (0, out_pad - fan_out)))
            b = jnp.pad(b, ((0, 0), (0, out_pad - fan_out)))
        params.extend([w.astype(jnp.bfloat16), b])
    return tuple(params)


def actor_reference_mixed(obs, params, num_actions):
    """Pure-JAX reference mirroring the kernel's bf16-matmul / f32-epilogue."""
    w1, b1, w2, b2, w3, b3, w4, b4 = params

    def layer(x, w, b, relu=True):
        y = jnp.dot(x.astype(jnp.bfloat16), w,
                    preferred_element_type=jnp.float32) + b
        return jnp.maximum(y, 0.0) if relu else y

    h = layer(obs, w1, b1)
    h = layer(h, w2, b2)
    h = layer(h, w3, b3)
    return layer(h, w4, b4, relu=False)[:, :num_actions]


def actor_reference_f32(obs, params, num_actions):
    """f32 semantics of the PyTorch module (weights upcast to f32)."""
    w1, b1, w2, b2, w3, b3, w4, b4 = params

    def layer(x, w, b, relu=True):
        y = x.astype(jnp.float32) @ w.astype(jnp.float32) + b
        return jnp.maximum(y, 0.0) if relu else y

    h = layer(obs, w1, b1)
    h = layer(h, w2, b2)
    h = layer(h, w3, b3)
    return layer(h, w4, b4, relu=False)[:, :num_actions]


# TODO(synk): optimizer / checkpoint I/O / device placement from the PyTorch
# module are training-time concerns with no Pallas forward-pass equivalent.

if __name__ == "__main__":
    dim_obs, num_actions = 16, 4
    fc1, fc2, fc3 = 32, 32, 32

    key = jax.random.PRNGKey(0)
    key, k_params = jax.random.split(key)
    params = init_actor_params(k_params, dim_obs, num_actions, fc1, fc2, fc3)

    # batch=2: tiny single-tile path; batch=600: multi-tile, in-kernel
    # chunking (1 full 256-row chunk + 48-row remainder) and batch padding.
    for batch in (2, 600):
        key, k_obs = jax.random.split(key)
        obs = jax.random.normal(k_obs, (batch, dim_obs), dtype=jnp.float32)

        out = jax.block_until_ready(
            actor_forward(obs, params, num_actions=num_actions))
        assert out.shape == (batch, num_actions), out.shape

        ref = actor_reference_mixed(obs, params, num_actions)
        assert jnp.allclose(out, ref, atol=1e-2, rtol=1e-2), (
            "mixed ref mismatch", batch, float(jnp.max(jnp.abs(out - ref))))

        ref32 = actor_reference_f32(obs, params, num_actions)
        assert jnp.allclose(out, ref32, atol=1e-1, rtol=1e-1), (
            "f32 ref mismatch", batch, float(jnp.max(jnp.abs(out - ref32))))

    print("KERNEL_OK")
</pallas_src>

<mosaic_0001>
module attributes {stable_mosaic.version = 11 : i64} {
  func.func @actor_kernel(%arg0: i32, %arg1: memref<16x16xf32, #tpu.memory_space<vmem>>, %arg2: memref<16x32xbf16, #tpu.memory_space<vmem>>, %arg3: memref<1x32xf32, #tpu.memory_space<vmem>>, %arg4: memref<32x32xbf16, #tpu.memory_space<vmem>>, %arg5: memref<1x32xf32, #tpu.memory_space<vmem>>, %arg6: memref<32x32xbf16, #tpu.memory_space<vmem>>, %arg7: memref<1x32xf32, #tpu.memory_space<vmem>>, %arg8: memref<32x8xbf16, #tpu.memory_space<vmem>>, %arg9: memref<1x8xf32, #tpu.memory_space<vmem>>, %arg10: memref<16x8xf32, #tpu.memory_space<vmem>>) attributes {dimension_semantics = [#tpu.dimension_semantics<parallel>], iteration_bounds = array<i64: 1>, scalar_prefetch = 0 : i64, scratch_operands = 0 : i64, tpu.core_type = #tpu.core_type<tc>, window_params = [{transform_indices = @transform_0, window_bounds = array<i64: 16, 16>}, {pipeline_mode = #tpu.pipeline_mode<synchronous>, transform_indices = @transform_1, window_bounds = array<i64: 16, 32>}, {pipeline_mode = #tpu.pipeline_mode<synchronous>, transform_indices = @transform_2, window_bounds = array<i64: 1, 32>}, {pipeline_mode = #tpu.pipeline_mode<synchronous>, transform_indices = @transform_3, window_bounds = array<i64: 32, 32>}, {pipeline_mode = #tpu.pipeline_mode<synchronous>, transform_indices = @transform_4, window_bounds = array<i64: 1, 32>}, {pipeline_mode = #tpu.pipeline_mode<synchronous>, transform_indices = @transform_5, window_bounds = array<i64: 32, 32>}, {pipeline_mode = #tpu.pipeline_mode<synchronous>, transform_indices = @transform_6, window_bounds = array<i64: 1, 32>}, {pipeline_mode = #tpu.pipeline_mode<synchronous>, transform_indices = @transform_7, window_bounds = array<i64: 32, 8>}, {pipeline_mode = #tpu.pipeline_mode<synchronous>, transform_indices = @transform_8, window_bounds = array<i64: 1, 8>}, {transform_indices = @transform_9, window_bounds = array<i64: 16, 8>}]} {
    %c0 = arith.constant 0 : index
    %c0_0 = arith.constant 0 : index
    %0 = vector.load %arg2[%c0, %c0_0] : memref<16x32xbf16, #tpu.memory_space<vmem>>, vector<16x32xbf16>
    %c0_1 = arith.constant 0 : index
    %c0_2 = arith.constant 0 : index
    %1 = vector.load %arg3[%c0_1, %c0_2] : memref<1x32xf32, #tpu.memory_space<vmem>>, vector<1x32xf32>
    %c0_3 = arith.constant 0 : index
    %c0_4 = arith.constant 0 : index
    %2 = vector.load %arg4[%c0_3, %c0_4] : memref<32x32xbf16, #tpu.memory_space<vmem>>, vector<32x32xbf16>
    %c0_5 = arith.constant 0 : index
    %c0_6 = arith.constant 0 : index
    %3 = vector.load %arg5[%c0_5, %c0_6] : memref<1x32xf32, #tpu.memory_space<vmem>>, vector<1x32xf32>
    %c0_7 = arith.constant 0 : index
    %c0_8 = arith.constant 0 : index
    %4 = vector.load %arg6[%c0_7, %c0_8] : memref<32x32xbf16, #tpu.memory_space<vmem>>, vector<32x32xbf16>
    %c0_9 = arith.constant 0 : index
    %c0_10 = arith.constant 0 : index
    %5 = vector.load %arg7[%c0_9, %c0_10] : memref<1x32xf32, #tpu.memory_space<vmem>>, vector<1x32xf32>
    %c0_11 = arith.constant 0 : index
    %c0_12 = arith.constant 0 : index
    %6 = vector.load %arg8[%c0_11, %c0_12] : memref<32x8xbf16, #tpu.memory_space<vmem>>, vector<32x8xbf16>
    %c0_13 = arith.constant 0 : index
    %c0_14 = arith.constant 0 : index
    %7 = vector.load %arg9[%c0_13, %c0_14] : memref<1x8xf32, #tpu.memory_space<vmem>>, vector<1x8xf32>
    %c0_15 = arith.constant 0 : index
    %c0_16 = arith.constant 0 : index
    %8 = vector.load %arg1[%c0_15, %c0_16] : memref<16x16xf32, #tpu.memory_space<vmem>>, vector<16x16xf32>
    %9 = arith.truncf %8 : vector<16x16xf32> to vector<16x16xbf16>
    %cst = arith.constant dense<0.000000e+00> : vector<16x32xf32>
    %10 = tpu.matmul %9, %0, %cst {dimension_numbers = #tpu.dot_dimension_numbers<[1], [0], [0], [1], [0, 0, 1, 1], [], []>} : vector<16x16xbf16>, vector<16x32xbf16>, vector<16x32xf32> -> vector<16x32xf32>
    %11 = vector.broadcast %1 : vector<1x32xf32> to vector<16x32xf32>
    %12 = arith.addf %10, %11 : vector<16x32xf32>
    %cst_17 = arith.constant 0.000000e+00 : f32
    %13 = vector.broadcast %cst_17 : f32 to vector<16x32xf32>
    %14 = arith.maximumf %12, %13 : vector<16x32xf32>
    %15 = arith.truncf %14 : vector<16x32xf32> to vector<16x32xbf16>
    %cst_18 = arith.constant dense<0.000000e+00> : vector<16x32xf32>
    %16 = tpu.matmul %15, %2, %cst_18 {dimension_numbers = #tpu.dot_dimension_numbers<[1], [0], [0], [1], [0, 0, 1, 1], [], []>} : vector<16x32xbf16>, vector<32x32xbf16>, vector<16x32xf32> -> vector<16x32xf32>
    %17 = vector.broadcast %3 : vector<1x32xf32> to vector<16x32xf32>
    %18 = arith.addf %16, %17 : vector<16x32xf32>
    %cst_19 = arith.constant 0.000000e+00 : f32
    %19 = vector.broadcast %cst_19 : f32 to vector<16x32xf32>
    %20 = arith.maximumf %18, %19 : vector<16x32xf32>
    %21 = arith.truncf %20 : vector<16x32xf32> to vector<16x32xbf16>
    %cst_20 = arith.constant dense<0.000000e+00> : vector<16x32xf32>
    %22 = tpu.matmul %21, %4, %cst_20 {dimension_numbers = #tpu.dot_dimension_numbers<[1], [0], [0], [1], [0, 0, 1, 1], [], []>} : vector<16x32xbf16>, vector<32x32xbf16>, vector<16x32xf32> -> vector<16x32xf32>
    %23 = vector.broadcast %5 : vector<1x32xf32> to vector<16x32xf32>
    %24 = arith.addf %22, %23 : vector<16x32xf32>
    %cst_21 = arith.constant 0.000000e+00 : f32
    %25 = vector.broadcast %cst_21 : f32 to vector<16x32xf32>
    %26 = arith.maximumf %24, %25 : vector<16x32xf32>
    %27 = arith.truncf %26 : vector<16x32xf32> to vector<16x32xbf16>
    %cst_22 = arith.constant dense<0.000000e+00> : vector<16x8xf32>
    %28 = tpu.matmul %27, %6, %cst_22 {dimension_numbers = #tpu.dot_dimension_numbers<[1], [0], [0], [1], [0, 0, 1, 1], [], []>} : vector<16x32xbf16>, vector<32x8xbf16>, vector<16x8xf32> -> vector<16x8xf32>
    %29 = vector.broadcast %7 : vector<1x8xf32> to vector<16x8xf32>
    %30 = arith.addf %28, %29 : vector<16x8xf32>
    %c0_23 = arith.constant 0 : index
    %c0_24 = arith.constant 0 : index
    %31 = vector.load %arg10[%c0_23, %c0_24] : memref<16x8xf32, #tpu.memory_space<vmem>>, vector<16x8xf32>
    tpu.vector_store %arg10[%c0_23, %c0_24], %30 {strides = array<i32>} : memref<16x8xf32, #tpu.memory_space<vmem>>, vector<16x8xf32>,
    return
  }
  func.func @transform_0(%arg0: i32) -> (i32, i32) {
    %c0_i32 = arith.constant 0 : i32
    %c0_i32_0 = arith.constant 0 : i32
    return %arg0, %c0_i32 : i32, i32
  }
  func.func @transform_1(%arg0: i32) -> (i32, i32) {
    %c0_i32 = arith.constant 0 : i32
    %c0_i32_0 = arith.constant 0 : i32
    %c0_i32_1 = arith.constant 0 : i32
    return %c0_i32, %c0_i32_0 : i32, i32
  }
  func.func @transform_2(%arg0: i32) -> (i32, i32) {
    %c0_i32 = arith.constant 0 : i32
    %c0_i32_0 = arith.constant 0 : i32
    %c0_i32_1 = arith.constant 0 : i32
    return %c0_i32, %c0_i32_0 : i32, i32
  }
  func.func @transform_3(%arg0: i32) -> (i32, i32) {
    %c0_i32 = arith.constant 0 : i32
    %c0_i32_0 = arith.constant 0 : i32
    %c0_i32_1 = arith.constant 0 : i32
    return %c0_i32, %c0_i32_0 : i32, i32
  }
  func.func @transform_4(%arg0: i32) -> (i32, i32) {
    %c0_i32 = arith.constant 0 : i32
    %c0_i32_0 = arith.constant 0 : i32
    %c0_i32_1 = arith.constant 0 : i32
    return %c0_i32, %c0_i32_0 : i32, i32
  }
  func.func @transform_5(%arg0: i32) -> (i32, i32) {
    %c0_i32 = arith.constant 0 : i32
    %c0_i32_0 = arith.constant 0 : i32
    %c0_i32_1 = arith.constant 0 : i32
    return %c0_i32, %c0_i32_0 : i32, i32
  }
  func.func @transform_6(%arg0: i32) -> (i32, i32) {
    %c0_i32 = arith.constant 0 : i32
    %c0_i32_0 = arith.constant 0 : i32
    %c0_i32_1 = arith.constant 0 : i32
    return %c0_i32, %c0_i32_0 : i32, i32
  }
  func.func @transform_7(%arg0: i32) -> (i32, i32) {
    %c0_i32 = arith.constant 0 : i32
    %c0_i32_0 = arith.constant 0 : i32
    %c0_i32_1 = arith.constant 0 : i32
    return %c0_i32, %c0_i32_0 : i32, i32
  }
  func.func @transform_8(%arg0: i32) -> (i32, i32) {
    %c0_i32 = arith.constant 0 : i32
    %c0_i32_0 = arith.constant 0 : i32
    %c0_i32_1 = arith.constant 0 : i32
    return %c0_i32, %c0_i32_0 : i32, i32
  }
  func.func @transform_9(%arg0: i32) -> (i32, i32) {
    %c0_i32 = arith.constant 0 : i32
    %c0_i32_0 = arith.constant 0 : i32
    return %arg0, %c0_i32 : i32, i32
  }
}

</mosaic_0001>

<llo_original>
// kernel: actor_forward.1
$region0: #{actor_forward.1}
  #allocation0 [shape = 'u32[]', space=smem, size = 0x4, offset = 0x4, fixed_abs, tag = 'smem constant byte address 0x4 - core index']
  #allocation1 [shape = 'u32[144,128]{1,0:T(1,128)}', space=vmem, size = 0x12000, scoped, tag = 'internal scratch']
  %s0 = inlined_call_operand.vmem [shape: f32[16,16], index: 0, kind: input, shape index: {}]
  %s1 = inlined_call_operand.vmem [shape: bf16[16,32], index: 1, kind: input, shape index: {}]
  %s2 = inlined_call_operand.hbm [shape: f32[1,32], index: 2, kind: input, shape index: {}]
  %s3 = inlined_call_operand.vmem [shape: bf16[32,32], index: 3, kind: input, shape index: {}]
  %s4 = inlined_call_operand.vmem [shape: f32[1,32], index: 4, kind: input, shape index: {}]
  %s5 = inlined_call_operand.vmem [shape: bf16[32,32], index: 5, kind: input, shape index: {}]
  %s6 = inlined_call_operand.vmem [shape: f32[1,32], index: 6, kind: input, shape index: {}]
  %s7 = inlined_call_operand.vmem [shape: bf16[32,8], index: 7, kind: input, shape index: {}]
  %s8 = inlined_call_operand.vmem [shape: f32[1,8], index: 8, kind: input, shape index: {}]
  %s9 = inlined_call_operand.vmem [shape: f32[16,8], index: 9, kind: output, shape index: {}]
  %s10 = sld [smem:[#allocation0]]
  $region50: #{actor_forward.1} parent=0
    _
  %s12 = ssub.s32 1, %s10
  %s13 = scalar_select 0, %s12, %s10
  $region1: #{actor_forward.1} parent=0
    #allocation2 [shape = 'u8[512]{0}', space=vmem, size = 0x400, scoped, tag = 'input window, operand 2, single buffered']
    #allocation3 [shape = 's32[1]{0}', space=sflag, size = 0x4, scoped, tag = 'scoped memory for actor_forward.1']
    %14 = vsyncpa [#allocation3], 0
    // Predicated region
    $region2: #{actor_forward.1} parent=1 // pred_check
      _
    $region3: #{actor_forward.1} parent=1 // pred_check_branch
      %16 = sbr.rel (0) target = $region5
    $region4: #{actor_forward.1} parent=1 // pred_region
      _
    $region5: #{actor_forward.1} parent=1 // pred_fallthru
      _
    // Predicated region
    $region6: #{actor_forward.1} parent=1 // pred_check
      _
    $region7: #{actor_forward.1} parent=1 // pred_check_branch
      %18 = sbr.rel (0) target = $region9
    $region8: #{actor_forward.1} parent=1 // pred_region
      _
    $region9: #{actor_forward.1} parent=1 // pred_fallthru
      _
    // Predicated region
    $region10: #{actor_forward.1} parent=1 // pred_check
      _
    $region11: #{actor_forward.1} parent=1 // pred_check_branch
      %20 = sbr.rel (0) target = $region13
    $region12: #{actor_forward.1} parent=1 // pred_region
      %s22 = ssub.s32 16, 16
      %23 = vsyncadd [#allocation3], %s22
      %s25 = sshll.u32 [#allocation2], 4
      %s26 = int_to_ptr.vmem [resolvable:$true] %s25
      %28 = dma.hbm_to_vmem [thread:$0]  %s2, 16, %s26, [#allocation3]
    $region13: #{actor_forward.1} parent=1 // pred_fallthru
      _
    // Predicated region
    $region14: #{actor_forward.1} parent=1 // pred_check
      _
    $region15: #{actor_forward.1} parent=1 // pred_check_branch
      %30 = sbr.rel (0) target = $region17
    $region16: #{actor_forward.1} parent=1 // pred_region
      _
    $region17: #{actor_forward.1} parent=1 // pred_fallthru
      _
    // Predicated region
    $region18: #{actor_forward.1} parent=1 // pred_check
      _
    $region19: #{actor_forward.1} parent=1 // pred_check_branch
      %32 = sbr.rel (0) target = $region21
    $region20: #{actor_forward.1} parent=1 // pred_region
      _
    $region21: #{actor_forward.1} parent=1 // pred_fallthru
      _
    // Predicated region
    $region22: #{actor_forward.1} parent=1 // pred_check
      _
    $region23: #{actor_forward.1} parent=1 // pred_check_branch
      %34 = sbr.rel (0) target = $region25
    $region24: #{actor_forward.1} parent=1 // pred_region
      _
    $region25: #{actor_forward.1} parent=1 // pred_fallthru
      _
    // Predicated region
    $region26: #{actor_forward.1} parent=1 // pred_check
      _
    $region27: #{actor_forward.1} parent=1 // pred_check_branch
      %36 = sbr.rel (0) target = $region29
    $region28: #{actor_forward.1} parent=1 // pred_region
      _
    $region29: #{actor_forward.1} parent=1 // pred_fallthru
      _
    // Predicated region
    $region30: #{actor_forward.1} parent=1 // pred_check
      _
    $region31: #{actor_forward.1} parent=1 // pred_check_branch
      %38 = sbr.rel (0) target = $region33
    $region32: #{actor_forward.1} parent=1 // pred_region
      _
    $region33: #{actor_forward.1} parent=1 // pred_fallthru
      _
    // Predicated region
    $region34: #{actor_forward.1} parent=1 // pred_check
      _
    $region35: #{actor_forward.1} parent=1 // pred_check_branch
      %40 = sbr.rel (0) target = $region37
    $region36: #{actor_forward.1} parent=1 // pred_region
      _
    $region37: #{actor_forward.1} parent=1 // pred_fallthru
      _
    // Predicated region
    $region38: #{actor_forward.1} parent=1 // pred_check
      _
    $region39: #{actor_forward.1} parent=1 // pred_check_branch
      %42 = sbr.rel (0) target = $region41
    $region40: #{actor_forward.1} parent=1 // pred_region
      %43 = dma.done [#allocation3], 16
    $region41: #{actor_forward.1} parent=1 // pred_fallthru
      _
    %v45 = vld [vmem:[%s1] sm:$0xf]
    %v46 = vld [vmem:[%s1 + $0x4] sm:$0xf]
    %v47 = vld [vmem:[#allocation2] sm:$0x1]
    %v48 = vld [vmem:[%s3] sm:$0xf]
    %v49 = vld [vmem:[%s3 + $0x4] sm:$0xf]
    %v50 = vld [vmem:[%s3 + $0x8] sm:$0xf]
    %v51 = vld [vmem:[%s3 + $0xc] sm:$0xf]
    %v52 = vld [vmem:[%s4] sm:$0x1]
    %v53 = vld [vmem:[%s5] sm:$0xf]
    %v54 = vld [vmem:[%s5 + $0x4] sm:$0xf]
    %v55 = vld [vmem:[%s5 + $0x8] sm:$0xf]
    %v56 = vld [vmem:[%s5 + $0xc] sm:$0xf]
    %v57 = vld [vmem:[%s6] sm:$0x1]
    %v58 = vld [vmem:[%s7] sm:$0xf]
    %v59 = vld [vmem:[%s7 + $0x4] sm:$0xf]
    %v60 = vld [vmem:[%s7 + $0x8] sm:$0xf]
    %v61 = vld [vmem:[%s7 + $0xc] sm:$0xf]
    %v62 = vld [vmem:[%s8] sm:$0x1]
    %v63 = vld [vmem:[%s0] sm:$0xff]
    %v64 = vld [vmem:[%s0 + $0x8] sm:$0xff]
    %v65 = vpack.c.bf16 %v64, %v63
    %v67 = vlaneseq
    %v68 = vshrl.u32 %v67, 7
    %v69 = vsub.s32 0, %v68
    %v70 = vrot.slane %v47, %v69
    %v74 = vunpack.c.l.b16 %v45
    %v75 = vunpack.c.l.b16 %v46
    %v76 = vpack.c.b16 %v75, %v74
    %vm78 = vcmask 130048
    %v80 = vsel %vm78, %v65, 0
    %82 = vmatprep.subr.bf16.mxu0 0
    %83 = vmatpush1.bf16.msra.mxu0 0
    %84 = vmatprep.subr.bf16.mxu0 0
    %85 = vmatpush1.bf16.msra.mxu0 0
    %86 = vmatprep.subr.bf16.mxu0 0
    %87 = vmatpush1.bf16.msra.mxu0 0
    %88 = vmatprep.subr.bf16.mxu0 0
    %89 = vmatpush1.bf16.msra.mxu0 0
    %90 = vmatprep.subr.bf16.mxu0 0
    %91 = vmatpush1.bf16.msra.mxu0 0
    %92 = vmatprep.subr.bf16.mxu0 0
    %93 = vmatpush1.bf16.msra.mxu0 0
    %94 = vmatprep.subr.bf16.mxu0 0
    %95 = vmatpush1.bf16.msra.mxu0 0
    %96 = vmatprep.subr.bf16.mxu0 0
    %97 = vmatpush1.bf16.msra.mxu0 %v76
    %98 = vmatprep.subr.bf16.mxu0 0
    %99 = vmatpush2.bf16.msra.mxu0 0
    %100 = vmatprep.subr.bf16.mxu0 0
    %101 = vmatpush2.bf16.msra.mxu0 0
    %102 = vmatprep.subr.bf16.mxu0 0
    %103 = vmatpush2.bf16.msra.mxu0 0
    %104 = vmatprep.subr.bf16.mxu0 0
    %105 = vmatpush2.bf16.msra.mxu0 0
    %106 = vmatprep.subr.bf16.mxu0 0
    %107 = vmatpush2.bf16.msra.mxu0 0
    %108 = vmatprep.subr.bf16.mxu0 0
    %109 = vmatpush2.bf16.msra.mxu0 0
    %110 = vmatprep.subr.bf16.mxu0 0
    %111 = vmatpush2.bf16.msra.mxu0 0
    %112 = vmatprep.subr.bf16.mxu0 0
    %113 = vmatpush2.bf16.msra.mxu0 0
    %114 = vmatprep.mubr.bf16.mxu0 0
    %115 = vmatmul.mubr.bf16.gmra.mxu0 %v80
    %v116 = vpop.f32.mrf.mxu0
    %v117 = vadd.f32 %v70, %v116
    %v118 = vpop.f32.mrf.mxu0
    %v119 = vpop.f32.mrf.mxu0
    %v120 = vadd.f32 %v70, %v119
    %v121 = vpop.f32.mrf.mxu0
    %122 = vdwg.mxu0
    %v123 = vmax.f32 %v117, 0.0
    %v124 = vmax.f32 %v120, 0.0
    %v125 = vpack.c.bf16 %v124, %v123
    %v127 = vlaneseq
    %v128 = vshrl.u32 %v127, 7
    %v129 = vsub.s32 0, %v128
    %v130 = vrot.slane %v52, %v129
    %v136 = vunpack.c.l.b16 %v48
    %v137 = vunpack.c.l.b16 %v49
    %v138 = vunpack.c.l.b16 %v50
    %v139 = vunpack.c.l.b16 %v51
    %v140 = vpack.c.b16 %v137, %v136
    %v141 = vpack.c.b16 %v139, %v138
    %vm144 = vcmask 261120
    %v146 = vsel %vm144, %v125, 0
    %148 = vmatprep.subr.bf16.mxu0 0
    %149 = vmatpush1.bf16.msra.mxu0 0
    %150 = vmatprep.subr.bf16.mxu0 0
    %151 = vmatpush1.bf16.msra.mxu0 0
    %152 = vmatprep.subr.bf16.mxu0 0
    %153 = vmatpush1.bf16.msra.mxu0 0
    %154 = vmatprep.subr.bf16.mxu0 0
    %155 = vmatpush1.bf16.msra.mxu0 0
    %156 = vmatprep.subr.bf16.mxu0 0
    %157 = vmatpush1.bf16.msra.mxu0 0
    %158 = vmatprep.subr.bf16.mxu0 0
    %159 = vmatpush1.bf16.msra.mxu0 0
    %160 = vmatprep.subr.bf16.mxu0 0
    %161 = vmatpush1.bf16.msra.mxu0 %v141
    %162 = vmatprep.subr.bf16.mxu0 0
    %163 = vmatpush1.bf16.msra.mxu0 %v140
    %164 = vmatprep.subr.bf16.mxu0 0
    %165 = vmatpush2.bf16.msra.mxu0 0
    %166 = vmatprep.subr.bf16.mxu0 0
    %167 = vmatpush2.bf16.msra.mxu0 0
    %168 = vmatprep.subr.bf16.mxu0 0
    %169 = vmatpush2.bf16.msra.mxu0 0
    %170 = vmatprep.subr.bf16.mxu0 0
    %171 = vmatpush2.bf16.msra.mxu0 0
    %172 = vmatprep.subr.bf16.mxu0 0
    %173 = vmatpush2.bf16.msra.mxu0 0
    %174 = vmatprep.subr.bf16.mxu0 0
    %175 = vmatpush2.bf16.msra.mxu0 0
    %176 = vmatprep.subr.bf16.mxu0 0
    %177 = vmatpush2.bf16.msra.mxu0 0
    %178 = vmatprep.subr.bf16.mxu0 0
    %179 = vmatpush2.bf16.msra.mxu0 0
    %180 = vmatprep.mubr.bf16.mxu0 0
    %181 = vmatmul.mubr.bf16.gmra.mxu0 %v146
    %v182 = vpop.f32.mrf.mxu0
    %v183 = vadd.f32 %v130, %v182
    %v184 = vpop.f32.mrf.mxu0
    %v185 = vpop.f32.mrf.mxu0
    %v186 = vadd.f32 %v130, %v185
    %v187 = vpop.f32.mrf.mxu0
    %188 = vdwg.mxu0
    %v189 = vmax.f32 %v183, 0.0
    %v190 = vmax.f32 %v186, 0.0
    %v191 = vpack.c.bf16 %v190, %v189
    %v193 = vlaneseq
    %v194 = vshrl.u32 %v193, 7
    %v195 = vsub.s32 0, %v194
    %v196 = vrot.slane %v57, %v195
    %v202 = vunpack.c.l.b16 %v53
    %v203 = vunpack.c.l.b16 %v54
    %v204 = vunpack.c.l.b16 %v55
    %v205 = vunpack.c.l.b16 %v56
    %v206 = vpack.c.b16 %v203, %v202
    %v207 = vpack.c.b16 %v205, %v204
    %v211 = vsel %vm144, %v191, 0
    %213 = vmatprep.subr.bf16.mxu0 0
    %214 = vmatpush1.bf16.msra.mxu0 0
    %215 = vmatprep.subr.bf16.mxu0 0
    %216 = vmatpush1.bf16.msra.mxu0 0
    %217 = vmatprep.subr.bf16.mxu0 0
    %218 = vmatpush1.bf16.msra.mxu0 0
    %219 = vmatprep.subr.bf16.mxu0 0
    %220 = vmatpush1.bf16.msra.mxu0 0
    %221 = vmatprep.subr.bf16.mxu0 0
    %222 = vmatpush1.bf16.msra.mxu0 0
    %223 = vmatprep.subr.bf16.mxu0 0
    %224 = vmatpush1.bf16.msra.mxu0 0
    %225 = vmatprep.subr.bf16.mxu0 0
    %226 = vmatpush1.bf16.msra.mxu0 %v207
    %227 = vmatprep.subr.bf16.mxu0 0
    %228 = vmatpush1.bf16.msra.mxu0 %v206
    %229 = vmatprep.subr.bf16.mxu0 0
    %230 = vmatpush2.bf16.msra.mxu0 0
    %231 = vmatprep.subr.bf16.mxu0 0
    %232 = vmatpush2.bf16.msra.mxu0 0
    %233 = vmatprep.subr.bf16.mxu0 0
    %234 = vmatpush2.bf16.msra.mxu0 0
    %235 = vmatprep.subr.bf16.mxu0 0
    %236 = vmatpush2.bf16.msra.mxu0 0
    %237 = vmatprep.subr.bf16.mxu0 0
    %238 = vmatpush2.bf16.msra.mxu0 0
    %239 = vmatprep.subr.bf16.mxu0 0
    %240 = vmatpush2.bf16.msra.mxu0 0
    %241 = vmatprep.subr.bf16.mxu0 0
    %242 = vmatpush2.bf16.msra.mxu0 0
    %243 = vmatprep.subr.bf16.mxu0 0
    %244 = vmatpush2.bf16.msra.mxu0 0
    %245 = vmatprep.mubr.bf16.mxu0 0
    %246 = vmatmul.mubr.bf16.gmra.mxu0 %v211
    %v247 = vpop.f32.mrf.mxu0
    %v248 = vadd.f32 %v196, %v247
    %v249 = vpop.f32.mrf.mxu0
    %v250 = vpop.f32.mrf.mxu0
    %v251 = vadd.f32 %v196, %v250
    %v252 = vpop.f32.mrf.mxu0
    %253 = vdwg.mxu0
    %v254 = vmax.f32 %v248, 0.0
    %v255 = vmax.f32 %v251, 0.0
    %v256 = vpack.c.bf16 %v255, %v254
    %v258 = vlaneseq
    %v259 = vshrl.u32 %v258, 7
    %v260 = vsub.s32 0, %v259
    %v261 = vrot.slane %v62, %v260
    %v267 = vunpack.c.l.b16 %v58
    %v268 = vunpack.c.l.b16 %v59
    %v269 = vunpack.c.l.b16 %v60
    %v270 = vunpack.c.l.b16 %v61
    %v271 = vpack.c.b16 %v268, %v267
    %v272 = vpack.c.b16 %v270, %v269
    %v276 = vsel %vm144, %v256, 0
    %278 = vmatprep.subr.bf16.mxu0 0
    %279 = vmatpush1.bf16.msra.mxu0 0
    %280 = vmatprep.subr.bf16.mxu0 0
    %281 = vmatpush1.bf16.msra.mxu0 0
    %282 = vmatprep.subr.bf16.mxu0 0
    %283 = vmatpush1.bf16.msra.mxu0 0
    %284 = vmatprep.subr.bf16.mxu0 0
    %285 = vmatpush1.bf16.msra.mxu0 0
    %286 = vmatprep.subr.bf16.mxu0 0
    %287 = vmatpush1.bf16.msra.mxu0 0
    %288 = vmatprep.subr.bf16.mxu0 0
    %289 = vmatpush1.bf16.msra.mxu0 0
    %290 = vmatprep.subr.bf16.mxu0 0
    %291 = vmatpush1.bf16.msra.mxu0 %v272
    %292 = vmatprep.subr.bf16.mxu0 0
    %293 = vmatpush1.bf16.msra.mxu0 %v271
    %294 = vmatprep.subr.bf16.mxu0 0
    %295 = vmatpush2.bf16.msra.mxu0 0
    %296 = vmatprep.subr.bf16.mxu0 0
    %297 = vmatpush2.bf16.msra.mxu0 0
    %298 = vmatprep.subr.bf16.mxu0 0
    %299 = vmatpush2.bf16.msra.mxu0 0
    %300 = vmatprep.subr.bf16.mxu0 0
    %301 = vmatpush2.bf16.msra.mxu0 0
    %302 = vmatprep.subr.bf16.mxu0 0
    %303 = vmatpush2.bf16.msra.mxu0 0
    %304 = vmatprep.subr.bf16.mxu0 0
    %305 = vmatpush2.bf16.msra.mxu0 0
    %306 = vmatprep.subr.bf16.mxu0 0
    %307 = vmatpush2.bf16.msra.mxu0 0
    %308 = vmatprep.subr.bf16.mxu0 0
    %309 = vmatpush2.bf16.msra.mxu0 0
    %310 = vmatprep.mubr.bf16.mxu0 0
    %311 = vmatmul.mubr.bf16.gmra.mxu0 %v276
    %v312 = vpop.f32.mrf.mxu0
    %v313 = vadd.f32 %v261, %v312
    %v314 = vpop.f32.mrf.mxu0
    %v315 = vpop.f32.mrf.mxu0
    %v316 = vadd.f32 %v261, %v315
    %v317 = vpop.f32.mrf.mxu0
    %318 = vdwg.mxu0
    %vm319 = vcmask 64512
    %320 = vst.msk [vmem:[%s9] sm:$0xff] %vm319, %v313
    %321 = vst.msk [vmem:[%s9 + $0x8] sm:$0xff] %vm319, %v316
    // Predicated region
    $region42: #{actor_forward.1} parent=1 // pred_check
      _
    $region43: #{actor_forward.1} parent=1 // pred_check_branch
      %323 = sbr.rel (0) target = $region45
    $region44: #{actor_forward.1} parent=1 // pred_region
      _
    $region45: #{actor_forward.1} parent=1 // pred_fallthru
      _
    // Predicated region
    $region46: #{actor_forward.1} parent=1 // pred_check
      _
    $region47: #{actor_forward.1} parent=1 // pred_check_branch
      %325 = sbr.rel (0) target = $region49
    $region48: #{actor_forward.1} parent=1 // pred_region
      _
    $region49: #{actor_forward.1} parent=1 // pred_fallthru
      _
    %326 = vsyncpa [#allocation3], 1

</llo_original>
